<compile_context>
chip_gen: v5e
topology: v5e:2x2
jax: 0.10.0
libtpu: 0.0.40
codegen_flags: <defaults>
</compile_context>

<pallas_src>
import math

import jax
import jax.numpy as jnp
from jax import lax
from jax.experimental import pallas as pl
from jax.experimental.pallas import tpu as pltpu


def _round_up(a, b):
    return ((a + b - 1) // b) * b


# ----------------------------------------------------------------------------
# Pallas kernel factory: weighted sum over the K (quadrature) axis of a block.
# ----------------------------------------------------------------------------
def _make_trapz_kernel(K, k_chunk):
    n_full = K // k_chunk
    rem = K - n_full * k_chunk

    def kernel(x_ref, w_ref, o_ref):
        # x_ref: (TILE_L, K, TILE_M) native dtype
        # w_ref: (1, K, 1) float32 (resident across all grid steps)
        # o_ref: (TILE_L, TILE_M) float32
        tl, _, tm = x_ref.shape

        def wsum(k0, size):
            xk = x_ref[:, pl.ds(k0, size), :].astype(jnp.float32)  # (TL, size, TM)
            wk = w_ref[:, pl.ds(k0, size), :]                       # (1, size, 1)
            return jnp.sum(xk * wk, axis=1)                         # (TL, TM)

        if n_full <= 1:
            # Small K: single expression, no loop.
            o_ref[...] = wsum(0, K)
        else:
            # Large K: chunked accumulation bounds the live f32 temporary.
            def body(i, acc):
                k0 = pl.multiple_of(i * k_chunk, k_chunk)
                return acc + wsum(k0, k_chunk)

            acc = lax.fori_loop(
                0, n_full, body,
                jnp.zeros((tl, tm), jnp.float32),
                unroll=(n_full <= 8),
            )
            if rem:
                acc = acc + wsum(n_full * k_chunk, rem)
            o_ref[...] = acc

    return kernel


# ----------------------------------------------------------------------------
# Wrapper
# ----------------------------------------------------------------------------
def trapezoid_quadrature(x, weights, dim=1, *,
                         block_bytes=3 * 1024 * 1024,
                         max_tile_m=8192,
                         k_chunk=8):
    """x: any-rank array; weights: (K,) f32 with K == x.shape[dim].
    Returns sum(x * broadcast(weights), axis=dim) in float32."""
    dim = dim % x.ndim
    K = x.shape[dim]
    weights = jnp.asarray(weights, jnp.float32)
    assert weights.shape == (K,), (weights.shape, K)

    pre = x.shape[:dim]
    post = x.shape[dim + 1:]
    L = math.prod(pre) if pre else 1
    M = math.prod(post) if post else 1

    # Free reshape: (L, K, M) with M on the lane axis; no pad, no dtype upcast.
    x3 = x.reshape(L, K, M)
    w3 = weights.reshape(1, K, 1)

    itemsize = x3.dtype.itemsize

    # --- Tile selection (budget-aware, ~block_bytes per x block) -------------
    # Lane tile: multiple of 128, capped so an 8-row block still fits budget.
    lanes_budget = max(128, (block_bytes // max(8 * K * itemsize, 1)) // 128 * 128)
    tile_m = min(_round_up(M, 128), max_tile_m, lanes_budget)
    # Row tile: multiple of 8, sized so TILE_L * K * TILE_M * itemsize ~ budget.
    row_bytes = K * tile_m * itemsize
    tile_l = max(8, (max(1, block_bytes // max(row_bytes, 1)) // 8) * 8)
    tile_l = min(tile_l, _round_up(L, 8))

    # Keep at least 2 grid steps along a parallel axis when there is enough
    # work (v7x: 2 TensorCores; also keeps both DMA queues busy).
    if pl.cdiv(L, tile_l) * pl.cdiv(M, tile_m) == 1:
        if L > 8:
            tile_l = max(8, _round_up(pl.cdiv(L, 2), 8))
        elif tile_m > 128 and M > 128:
            tile_m = max(128, _round_up(pl.cdiv(M, 2), 128))

    grid = (pl.cdiv(L, tile_l), pl.cdiv(M, tile_m))

    kernel = _make_trapz_kernel(K, k_chunk)

    out = pl.pallas_call(
        kernel,
        out_shape=jax.ShapeDtypeStruct((L, M), jnp.float32),
        grid_spec=pltpu.PrefetchScalarGridSpec(
            num_scalar_prefetch=0,
            grid=grid,
            in_specs=[
                pl.BlockSpec((tile_l, K, tile_m), lambda l, t: (l, 0, t)),
                pl.BlockSpec((1, K, 1), lambda l, t: (0, 0, 0)),  # weights, resident
            ],
            out_specs=pl.BlockSpec((tile_l, tile_m), lambda l, t: (l, t)),
        ),
        compiler_params=pltpu.CompilerParams(
            # Independent output tiles, no carried state -> fully parallel.
            dimension_semantics=("parallel", "parallel"),
            # <= default on v6e/v7x, raises v5e's 16 MiB default; blocks are
            # ~3 MiB double-buffered so this leaves ample headroom everywhere.
            vmem_limit_bytes=32 << 20,
        ),
        cost_estimate=pl.CostEstimate(
            flops=2 * L * K * M,
            transcendentals=0,
            bytes_accessed=L * K * M * itemsize + L * M * 4 + K * 4,
        ),
    )(x3, w3)

    return out.reshape(pre + post)


class TrapezoidQuadrature:
    """JAX/Pallas port of the PyTorch TrapezoidQuadrature module (forward only)."""

    def __init__(self, num_intervals, interval_width, device=None):
        del device  # kept for signature parity with the torch module
        w = [float(interval_width)] * (num_intervals + 1)
        w[0] *= 0.5
        w[-1] *= 0.5
        self.weights = jnp.asarray(w, dtype=jnp.float32)

    def __call__(self, x, dim=1):
        return trapezoid_quadrature(x, self.weights, dim=dim)


# ----------------------------------------------------------------------------
# Reference (pure JAX) for sanity checking.
# ----------------------------------------------------------------------------
def trapezoid_quadrature_ref(x, weights, dim=1):
    dim = dim % x.ndim
    shape = [1] * x.ndim
    shape[dim] = -1
    return jnp.sum(x.astype(jnp.float32) * weights.reshape(shape), axis=dim)


if __name__ == "__main__":
    key = jax.random.PRNGKey(0)

    # Case 1: the module's canonical use — NCHW, reduce dim=1, K = intervals+1.
    num_intervals = 8
    interval_width = 0.1
    B, H, W = 2, 16, 16
    K = num_intervals + 1
    x = jax.random.normal(key, (B, K, H, W), dtype=jnp.float32)
    quad = TrapezoidQuadrature(num_intervals, interval_width)
    out = jax.block_until_ready(quad(x, dim=1))
    ref = jax.block_until_ready(trapezoid_quadrature_ref(x, quad.weights, dim=1))
    assert out.shape == ref.shape, (out.shape, ref.shape)
    assert jnp.allclose(out, ref, rtol=1e-5, atol=1e-5)

    # Case 2: bf16 input, non-128-multiple trailing size (exercises the ragged
    # lane/row masking path — no jnp.pad copy is made).
    k2, k3 = jax.random.split(key)
    xb = jax.random.normal(k2, (2, K, 15, 15), dtype=jnp.bfloat16)
    outb = jax.block_until_ready(quad(xb, dim=1))
    refb = jax.block_until_ready(trapezoid_quadrature_ref(xb, quad.weights, dim=1))
    assert outb.shape == refb.shape
    assert jnp.allclose(outb, refb, rtol=1e-5, atol=1e-5)

    # Case 3: larger K (exercises the chunked fori_loop accumulation path).
    quad_big = TrapezoidQuadrature(39, 0.05)
    xk = jax.random.normal(k3, (2, 40, 4, 16), dtype=jnp.float32)
    outk = jax.block_until_ready(quad_big(xk, dim=1))
    refk = jax.block_until_ready(trapezoid_quadrature_ref(xk, quad_big.weights, dim=1))
    assert outk.shape == refk.shape
    assert jnp.allclose(outk, refk, rtol=1e-5, atol=1e-5)

    print("KERNEL_OK")
</pallas_src>

<mosaic_0001>
module attributes {stable_mosaic.version = 11 : i64} {
  func.func @kernel(%arg0: i32, %arg1: i32, %arg2: memref<8x9x128xf32, #tpu.memory_space<vmem>>, %arg3: memref<1x9x1xf32, #tpu.memory_space<vmem>>, %arg4: memref<8x128xf32, #tpu.memory_space<vmem>>) attributes {dimension_semantics = [#tpu.dimension_semantics<parallel>, #tpu.dimension_semantics<parallel>], iteration_bounds = array<i64: 1, 2>, scalar_prefetch = 0 : i64, scratch_operands = 0 : i64, tpu.core_type = #tpu.core_type<tc>, window_params = [{transform_indices = @transform_0, window_bounds = array<i64: 8, 9, 128>}, {pipeline_mode = #tpu.pipeline_mode<synchronous>, transform_indices = @transform_1, window_bounds = array<i64: 1, 9, 1>}, {transform_indices = @transform_2, window_bounds = array<i64: 8, 128>}]} {
    %c0 = arith.constant 0 : index
    %c0_0 = arith.constant 0 : index
    %c0_1 = arith.constant 0 : index
    %0 = vector.load %arg2[%c0, %c0_0, %c0_1] : memref<8x9x128xf32, #tpu.memory_space<vmem>>, vector<8x9x128xf32>
    %c0_2 = arith.constant 0 : index
    %c0_3 = arith.constant 0 : index
    %c0_4 = arith.constant 0 : index
    %1 = vector.load %arg3[%c0_2, %c0_3, %c0_4] : memref<1x9x1xf32, #tpu.memory_space<vmem>>, vector<1x9x1xf32>
    %2 = vector.broadcast %1 : vector<1x9x1xf32> to vector<8x9x128xf32>
    %3 = arith.mulf %0, %2 : vector<8x9x128xf32>
    %cst = arith.constant dense<0.000000e+00> : vector<8x128xf32>
    %4 = vector.multi_reduction <add>, %3, %cst [1] : vector<8x9x128xf32> to vector<8x128xf32>
    %c0_5 = arith.constant 0 : index
    %c0_6 = arith.constant 0 : index
    %5 = vector.load %arg4[%c0_5, %c0_6] : memref<8x128xf32, #tpu.memory_space<vmem>>, vector<8x128xf32>
    tpu.vector_store %arg4[%c0_5, %c0_6], %4 {strides = array<i32>} : memref<8x128xf32, #tpu.memory_space<vmem>>, vector<8x128xf32>,
    return
  }
  func.func @transform_0(%arg0: i32, %arg1: i32) -> (i32, i32, i32) {
    %c0_i32 = arith.constant 0 : i32
    %c0_i32_0 = arith.constant 0 : i32
    return %arg0, %c0_i32, %arg1 : i32, i32, i32
  }
  func.func @transform_1(%arg0: i32, %arg1: i32) -> (i32, i32, i32) {
    %c0_i32 = arith.constant 0 : i32
    %c0_i32_0 = arith.constant 0 : i32
    %c0_i32_1 = arith.constant 0 : i32
    %c0_i32_2 = arith.constant 0 : i32
    return %c0_i32, %c0_i32_0, %c0_i32_1 : i32, i32, i32
  }
  func.func @transform_2(%arg0: i32, %arg1: i32) -> (i32, i32) {
    %c0_i32 = arith.constant 0 : i32
    return %arg0, %arg1 : i32, i32
  }
}

</mosaic_0001>

<llo_original>
// kernel: tpu_custom_call.1
$region0: #{tpu_custom_call.1}
  #allocation0 [shape = 'u32[]', space=smem, size = 0x4, offset = 0x4, fixed_abs, tag = 'smem constant byte address 0x4 - core index']
  #allocation1 [shape = 'u32[72,128]{1,0:T(1,128)}', space=vmem, size = 0x9000, scoped, tag = 'internal scratch']
  %s0 = inlined_call_operand.vmem [shape: f32[2,9,256], index: 0, kind: input, shape index: {}]
  %s1 = inlined_call_operand.vmem [shape: f32[1,9,1], index: 1, kind: input, shape index: {}]
  %s2 = inlined_call_operand.hbm [shape: f32[2,256], index: 2, kind: output, shape index: {}]
  %s3 = sld [smem:[#allocation0]]
  $region93: #{tpu_custom_call.1} parent=0
    _
  %s5 = ssub.s32 1, %s3
  %s6 = scalar_select 0, %s5, %s3
  $region1: #{tpu_custom_call.1} parent=0
    #allocation2 [shape = 'u8[131072]{0}', space=vmem, size = 0x20000, scoped, tag = 'input window, operand 0']
    #allocation3 [shape = 'u8[8192]{0}', space=vmem, size = 0x2000, scoped, tag = 'output window, operand 0']
    #allocation4 [shape = 's32[2]{0}', space=sflag, size = 0x8, scoped, tag = 'scoped memory for tpu_custom_call.1']
    %7 = vsyncpa [#allocation4], 0
    %s8 = scalar_lea.sflag [#allocation4], 1
    %9 = vsyncpa %s8, 0
    loop: start=0, step=1, limit=4
    $region2: #{tpu_custom_call.1} parent=1 // loop_pre_header
      _
    $region3: #{tpu_custom_call.1} parent=1 // loop_header
      %s11 = sphi 0, %s15
      %p12 = scmp.ge.s32.totalorder %s11, 4
      %s18 = sphi 0, %s30
      %s19 = sphi 0, %s26
      %s20 = sphi 0, %s18
      %s21 = sphi 0, %s19
      %s22 = sphi 0, %s20
      %s23 = sphi 0, %s21
      %s35 = sphi 0, %s37
      %s38 = sphi 0, %s35
      %s39 = sphi 0, %s38
      %s55 = sphi 0, %s39
      %s59 = sphi 0, %s59
      %s61 = sphi 0, %s59
      %s62 = sphi 0, %s61
      %s76 = sphi 0, %s62
      %s84 = sphi 0, %s86
      %s87 = sphi 0, %s84
      %s88 = sphi 0, %s87
      %s104 = sphi 0, %s88
    $region4: #{tpu_custom_call.1} parent=1 // loop_header_branch
      %14 = sbr.rel (%p12) target = $region8
    $region5: #{tpu_custom_call.1} parent=1 // loop_body
      %s16 = ssub.s32 %s11, 1
      %s17 = ssub.s32 %s11, 2
      %s24 = sadd.s32 1, %s19
      %p25 = scmp.ge.s32.totalorder %s24, 2
      %s26 = scalar_select %p25, 0, %s24
      %s27 = sadd.s32 1, %s18
      %s28 = scalar_select %p25, %s27, %s18
      %p29 = scmp.ge.s32.totalorder %s28, 1
      %s30 = scalar_select %p29, 0, %s28
      %s31 = ssub.s32 %s18, %s30
      %s32 = ssub.s32 %s19, %s26
      %s33 = sor.u32 %s31, %s32
      %p34 = scmp.eq.s32.totalorder %s33, 0
      %s36 = sadd.s32 %s35, 1
      %s37 = scalar_select %p34, %s35, %s36
      %p40 = pneg %p34
      %p41 = scmp.eq.s32.totalorder %s11, 1
      %p42 = por %p40, %p41
      %p43 = scmp.ne.s32.totalorder %s35, %s38
      %p44 = scmp.eq.s32.totalorder %s11, 0
      %p45 = por %p43, %p44
      %p46 = scmp.ne.s32.totalorder %s35, %s38
      %p47 = scmp.eq.s32.totalorder %s16, 1
      %p48 = por %p46, %p47
      %p49 = scmp.ne.s32.totalorder %s38, %s39
      %p50 = scmp.eq.s32.totalorder %s16, 0
      %p51 = por %p49, %p50
      %p52 = scmp.ne.s32.totalorder %s38, %s39
      %p53 = scmp.eq.s32.totalorder %s17, 1
      %p54 = por %p52, %p53
      %p56 = scmp.ne.s32.totalorder %s39, %s55
      %p57 = scmp.eq.s32.totalorder %s17, 0
      %p58 = por %p56, %p57
      %s60 = sadd.s32 %s59, 1
      %p63 = scmp.eq.s32.totalorder %s11, 1
      %p64 = scmp.ne.s32.totalorder %s59, %s61
      %p65 = scmp.eq.s32.totalorder %s11, 0
      %p66 = por %p64, %p65
      %p67 = scmp.ne.s32.totalorder %s59, %s61
      %p68 = scmp.eq.s32.totalorder %s16, 1
      %p69 = por %p67, %p68
      %p70 = scmp.ne.s32.totalorder %s61, %s62
      %p71 = scmp.eq.s32.totalorder %s16, 0
      %p72 = por %p70, %p71
      %p73 = scmp.ne.s32.totalorder %s61, %s62
      %p74 = scmp.eq.s32.totalorder %s17, 1
      %p75 = por %p73, %p74
      %p77 = scmp.ne.s32.totalorder %s62, %s76
      %p78 = scmp.eq.s32.totalorder %s17, 0
      %p79 = por %p77, %p78
      %s80 = ssub.s32 %s18, %s30
      %s81 = ssub.s32 %s19, %s26
      %s82 = sor.u32 %s80, %s81
      %p83 = scmp.eq.s32.totalorder %s82, 0
      %s85 = sadd.s32 %s84, 1
      %s86 = scalar_select %p83, %s84, %s85
      %p89 = pneg %p83
      %p90 = scmp.eq.s32.totalorder %s11, 1
      %p91 = por %p89, %p90
      %p92 = scmp.ne.s32.totalorder %s84, %s87
      %p93 = scmp.eq.s32.totalorder %s11, 0
      %p94 = por %p92, %p93
      %p95 = scmp.ne.s32.totalorder %s84, %s87
      %p96 = scmp.eq.s32.totalorder %s16, 1
      %p97 = por %p95, %p96
      %p98 = scmp.ne.s32.totalorder %s87, %s88
      %p99 = scmp.eq.s32.totalorder %s16, 0
      %p100 = por %p98, %p99
      %p101 = scmp.ne.s32.totalorder %s87, %s88
      %p102 = scmp.eq.s32.totalorder %s17, 1
      %p103 = por %p101, %p102
      %p105 = scmp.ne.s32.totalorder %s88, %s104
      %p106 = scmp.eq.s32.totalorder %s17, 0
      %p107 = por %p105, %p106
      %p108 = scmp.le.s32.totalorder 1, %s11
      %p109 = scmp.lt.s32.totalorder %s11, 3
      %p110 = pnand %p108, %p109
      %p111 = pneg %p110
      // Predicated region
      $region9: #{tpu_custom_call.1} parent=5 // pred_check
        _
      $region10: #{tpu_custom_call.1} parent=5 // pred_check_branch
        %113 = sbr.rel (%p110) target = $region12
      $region11: #{tpu_custom_call.1} parent=5 // pred_region
        %s114 = ssub.s32 %s11, 1
        // Predicated region
        $region13: #{tpu_custom_call.1} parent=11 // pred_check
          %p115 = pneg %p72
        $region14: #{tpu_custom_call.1} parent=11 // pred_check_branch
          %117 = sbr.rel (%p115) target = $region16
        $region15: #{tpu_custom_call.1} parent=11 // pred_region
          _
        $region16: #{tpu_custom_call.1} parent=11 // pred_fallthru
          _
      $region12: #{tpu_custom_call.1} parent=5 // pred_fallthru
        _
      %p118 = scmp.lt.s32.totalorder %s11, 2
      // Predicated region
      $region17: #{tpu_custom_call.1} parent=5 // pred_check
        %p119 = pneg %p118
      $region18: #{tpu_custom_call.1} parent=5 // pred_check_branch
        %121 = sbr.rel (%p119) target = $region20
      $region19: #{tpu_custom_call.1} parent=5 // pred_region
        // Predicated region
        $region21: #{tpu_custom_call.1} parent=19 // pred_check
          %p122 = pneg %p45
        $region22: #{tpu_custom_call.1} parent=19 // pred_check_branch
          %124 = sbr.rel (%p122) target = $region24
        $region23: #{tpu_custom_call.1} parent=19 // pred_region
          %s125 = sand.u32 %s35, 1
          %s126 = sand.u32 %s35, 1
          %s127 = smul.addr %s126, 128
          %s128 = scalar_lea.vmem [#allocation2], %s127
          %s129 = smul.u32 8, %s18
          %s130 = ssub.s32 2, %s129
          %s131 = smul.u32 8, %s130
          %s132 = smul.u32 %s131, 2
          %p133 = scmp.ne.s32.totalorder 0, %s132
          %s134 = smul.addr %s129, 4
          %s135 = sadd.s32 %s19, %s134
          %s136 = smul.addr %s135, 8
          %s137 = scalar_lea.vmem %s0, %s136
          %s138 = smul.u32 %s130, 2
          // Predicated region
          $region25: #{tpu_custom_call.1} parent=23 // pred_check
            %p139 = pneg %p133
          $region26: #{tpu_custom_call.1} parent=23 // pred_check_branch
            %141 = sbr.rel (%p139) target = $region28
          $region27: #{tpu_custom_call.1} parent=23 // pred_region
            // Predicated region
            $region29: #{tpu_custom_call.1} parent=27 // pred_check
              _
            $region30: #{tpu_custom_call.1} parent=27 // pred_check_branch
              %143 = sbr.rel (0) target = $region32
            $region31: #{tpu_custom_call.1} parent=27 // pred_region
              // Predicated region
              $region51: #{tpu_custom_call.1} parent=31 // pred_check
                _
              $region52: #{tpu_custom_call.1} parent=31 // pred_check_branch
                %199 = sbr.rel (0) target = $region54
              $region53: #{tpu_custom_call.1} parent=31 // pred_region
                %s200 = sshrl.u32 %s138, 2
                // While loop
                $region55: #{tpu_custom_call.1} parent=53 // loop_pre_header
                  _
                $region56: #{tpu_custom_call.1} parent=53 // loop_header
                  %s202 = sphi 0, %s204
                  %p203 = scmp.ge.s32.totalorder %s202, %s200
                  %s207 = sphi 0, %s220
                  %s208 = sphi %s137, %s223
                  %s209 = sphi %s128, %s224
                $region57: #{tpu_custom_call.1} parent=53 // loop_header_branch
                  %206 = sbr.rel (%p203) target = $region61
                $region58: #{tpu_custom_call.1} parent=53 // loop_body
                  %v210 = vld [vmem:[%s208] sm:$0xff]
                  %211 = vst [vmem:[%s209] sm:$0xff] %v210
                  %v212 = vld [vmem:[%s208 + $0x10] sm:$0xff]
                  %213 = vst [vmem:[%s209 + $0x8] sm:$0xff] %v212
                  %v214 = vld [vmem:[%s208 + $0x20] sm:$0xff]
                  %215 = vst [vmem:[%s209 + $0x10] sm:$0xff] %v214
                  %v216 = vld [vmem:[%s208 + $0x30] sm:$0xff]
                  %217 = vst [vmem:[%s209 + $0x18] sm:$0xff] %v216
                  %s218 = sadd.s32 1, %s207
                  %p219 = scmp.ge.s32.totalorder %s218, %s200
                  %s220 = scalar_select %p219, 0, %s218
                  %s221 = smul.u32 %s220, 64
                  %s222 = smul.u32 %s220, 32
                  %s223 = scalar_lea.vmem %s137, %s221
                  %s224 = scalar_lea.vmem %s128, %s222 [#allocation2]
                $region59: #{tpu_custom_call.1} parent=53 // loop_footer
                  %s204 = sadd.s32 %s202, 1
                $region60: #{tpu_custom_call.1} parent=53 // loop_footer_branch
                  %201 = sbr.rel target = $region56
                $region61: #{tpu_custom_call.1} parent=53 // loop_exit
                  _
                %s225 = sshrl.u32 %s138, 2
                %s226 = sand.u32 %s138, 3
                %s227 = smul.u32 %s225, 4
                %s228 = smul.u32 16, %s227
                %s229 = scalar_lea.vmem %s137, %s228
                %s230 = smul.u32 8, %s227
                %s231 = scalar_lea.vmem %s128, %s230 [#allocation2]
                // While loop
                $region62: #{tpu_custom_call.1} parent=53 // loop_pre_header
                  _
                $region63: #{tpu_custom_call.1} parent=53 // loop_header
                  %s233 = sphi 0, %s235
                  %p234 = scmp.ge.s32.totalorder %s233, %s226
                  %s238 = sphi 0, %s245
                  %s239 = sphi %s229, %s248
                  %s240 = sphi %s231, %s249
                $region64: #{tpu_custom_call.1} parent=53 // loop_header_branch
                  %237 = sbr.rel (%p234) target = $region68
                $region65: #{tpu_custom_call.1} parent=53 // loop_body
                  %v241 = vld [vmem:[%s239] sm:$0xff]
                  %242 = vst [vmem:[%s240] sm:$0xff] %v241
                  %s243 = sadd.s32 1, %s238
                  %p244 = scmp.ge.s32.totalorder %s243, %s226
                  %s245 = scalar_select %p244, 0, %s243
                  %s246 = smul.u32 %s245, 16
                  %s247 = smul.u32 %s245, 8
                  %s248 = scalar_lea.vmem %s229, %s246
                  %s249 = scalar_lea.vmem %s231, %s247 [#allocation2]
                $region66: #{tpu_custom_call.1} parent=53 // loop_footer
                  %s235 = sadd.s32 %s233, 1
                $region67: #{tpu_custom_call.1} parent=53 // loop_footer_branch
                  %232 = sbr.rel target = $region63
                $region68: #{tpu_custom_call.1} parent=53 // loop_exit
                  _
              $region54: #{tpu_custom_call.1} parent=31 // pred_fallthru
                _
              // Predicated region
              $region69: #{tpu_custom_call.1} parent=31 // pred_check
                _
              $region70: #{tpu_custom_call.1} parent=31 // pred_check_branch
                %251 = sbr.rel target = $region72
              $region71: #{tpu_custom_call.1} parent=31 // pred_region
                _
              $region72: #{tpu_custom_call.1} parent=31 // pred_fallthru
                _
            $region32: #{tpu_custom_call.1} parent=27 // pred_fallthru
              _
            // Predicated region
            $region33: #{tpu_custom_call.1} parent=27 // pred_check
              _
            $region34: #{tpu_custom_call.1} parent=27 // pred_check_branch
              %145 = sbr.rel target = $region36
            $region35: #{tpu_custom_call.1} parent=27 // pred_region
              %s147 = ssub.s32 256, 1
              %s148 = sshrl.u32 %s138, 2
              // While loop
              $region37: #{tpu_custom_call.1} parent=35 // loop_pre_header
                _
              $region38: #{tpu_custom_call.1} parent=35 // loop_header
                %s150 = sphi 0, %s152
                %p151 = scmp.ge.s32.totalorder %s150, %s148
                %s155 = sphi 0, %s168
                %s156 = sphi %s137, %s171
                %s157 = sphi %s128, %s172
              $region39: #{tpu_custom_call.1} parent=35 // loop_header_branch
                %154 = sbr.rel (%p151) target = $region43
              $region40: #{tpu_custom_call.1} parent=35 // loop_body
                %v158 = vld [vmem:[%s156] sm:%s147]
                %159 = vst [vmem:[%s157] sm:%s147] %v158
                %v160 = vld [vmem:[%s156 + $0x10] sm:%s147]
                %161 = vst [vmem:[%s157 + $0x8] sm:%s147] %v160
                %v162 = vld [vmem:[%s156 + $0x20] sm:%s147]
                %163 = vst [vmem:[%s157 + $0x10] sm:%s147] %v162
                %v164 = vld [vmem:[%s156 + $0x30] sm:%s147]
                %165 = vst [vmem:[%s157 + $0x18] sm:%s147] %v164
                %s166 = sadd.s32 1, %s155
                %p167 = scmp.ge.s32.totalorder %s166, %s148
                %s168 = scalar_select %p167, 0, %s166
                %s169 = smul.u32 %s168, 64
                %s170 = smul.u32 %s168, 32
                %s171 = scalar_lea.vmem %s137, %s169
                %s172 = scalar_lea.vmem %s128, %s170 [#allocation2]
              $region41: #{tpu_custom_call.1} parent=35 // loop_footer
                %s152 = sadd.s32 %s150, 1
              $region42: #{tpu_custom_call.1} parent=35 // loop_footer_branch
                %149 = sbr.rel target = $region38
              $region43: #{tpu_custom_call.1} parent=35 // loop_exit
                _
              %s173 = sshrl.u32 %s138, 2
              %s174 = sand.u32 %s138, 3
              %s175 = smul.u32 %s173, 4
              %s176 = smul.u32 16, %s175
              %s177 = scalar_lea.vmem %s137, %s176
              %s178 = smul.u32 8, %s175
              %s179 = scalar_lea.vmem %s128, %s178 [#allocation2]
              // While loop
              $region44: #{tpu_custom_call.1} parent=35 // loop_pre_header
                _
              $region45: #{tpu_custom_call.1} parent=35 // loop_header
                %s181 = sphi 0, %s183
                %p182 = scmp.ge.s32.totalorder %s181, %s174
                %s186 = sphi 0, %s193
                %s187 = sphi %s177, %s196
                %s188 = sphi %s179, %s197
              $region46: #{tpu_custom_call.1} parent=35 // loop_header_branch
                %185 = sbr.rel (%p182) target = $region50
              $region47: #{tpu_custom_call.1} parent=35 // loop_body
                %v189 = vld [vmem:[%s187] sm:%s147]
                %190 = vst [vmem:[%s188] sm:%s147] %v189
                %s191 = sadd.s32 1, %s186
                %p192 = scmp.ge.s32.totalorder %s191, %s174
                %s193 = scalar_select %p192, 0, %s191
                %s194 = smul.u32 %s193, 16
                %s195 = smul.u32 %s193, 8
                %s196 = scalar_lea.vmem %s177, %s194
                %s197 = scalar_lea.vmem %s179, %s195 [#allocation2]
              $region48: #{tpu_custom_call.1} parent=35 // loop_footer
                %s183 = sadd.s32 %s181, 1
              $region49: #{tpu_custom_call.1} parent=35 // loop_footer_branch
                %180 = sbr.rel target = $region45
              $region50: #{tpu_custom_call.1} parent=35 // loop_exit
                _
            $region36: #{tpu_custom_call.1} parent=27 // pred_fallthru
              _
          $region28: #{tpu_custom_call.1} parent=23 // pred_fallthru
            _
          %252 = vnop
        $region24: #{tpu_custom_call.1} parent=19 // pred_fallthru
          _
      $region20: #{tpu_custom_call.1} parent=5 // pred_fallthru
        _
      %p253 = scmp.le.s32.totalorder 1, %s11
      %p254 = scmp.lt.s32.totalorder %s11, 3
      %p255 = pnand %p253, %p254
      %p256 = pneg %p255
      // Predicated region
      $region73: #{tpu_custom_call.1} parent=5 // pred_check
        _
      $region74: #{tpu_custom_call.1} parent=5 // pred_check_branch
        %258 = sbr.rel (%p255) target = $region76
      $region75: #{tpu_custom_call.1} parent=5 // pred_region
        %s259 = ssub.s32 %s11, 1
        %s260 = sand.u32 %s38, 1
        %s261 = sand.u32 %s38, 1
        %s262 = smul.addr %s261, 128
        %s263 = scalar_lea.vmem [#allocation2], %s262
        // Predicated region
        $region77: #{tpu_custom_call.1} parent=75 // pred_check
          %p264 = pneg %p51
        $region78: #{tpu_custom_call.1} parent=75 // pred_check_branch
          %266 = sbr.rel (%p264) target = $region80
        $region79: #{tpu_custom_call.1} parent=75 // pred_region
          _
        $region80: #{tpu_custom_call.1} parent=75 // pred_fallthru
          _
        %s267 = sand.u32 %s38, 1
        %s268 = sand.u32 %s38, 1
        %s269 = smul.addr %s268, 128
        %s270 = scalar_lea.vmem [#allocation2], %s269
        %p271 = pneg %p51
        %p272 = pneg %p48
        %p273 = pneg %p72
        %p274 = pneg %p69
        %p275 = pneg %p100
        %p276 = pneg %p97
        %s277 = sand.u32 %s87, 1
        %s278 = scalar_lea.sflag [#allocation4], %s277
        %s279 = sand.u32 %s87, 1
        %s280 = smul.addr %s279, 8
        %s281 = scalar_lea.vmem [#allocation3], %s280
        %s282 = smul.u32 8, %s20
        %s283 = ssub.s32 2, %s282
        %s284 = smul.u32 8, %s283
        %s285 = smul.u32 %s284, 2
        %s286 = smul.u32 4, %s20
        %s287 = ssub.s32 1, %s286
        %s288 = smul.u32 2, %s287
        %v289 = vld [vmem:[%s263] sm:$0xff]
        %v290 = vld [vmem:[%s263 + $0x8] sm:$0x1]
        %v291 = vld [vmem:[%s263 + $0x10] sm:$0xff]
        %v292 = vld [vmem:[%s263 + $0x18] sm:$0x1]
        %v293 = vld [vmem:[%s263 + $0x20] sm:$0xff]
        %v294 = vld [vmem:[%s263 + $0x28] sm:$0x1]
        %v295 = vld [vmem:[%s263 + $0x30] sm:$0xff]
        %v296 = vld [vmem:[%s263 + $0x38] sm:$0x1]
        %v297 = vld [vmem:[%s263 + $0x40] sm:$0xff]
        %v298 = vld [vmem:[%s263 + $0x48] sm:$0x1]
        %v299 = vld [vmem:[%s263 + $0x50] sm:$0xff]
        %v300 = vld [vmem:[%s263 + $0x58] sm:$0x1]
        %v301 = vld [vmem:[%s263 + $0x60] sm:$0xff]
        %v302 = vld [vmem:[%s263 + $0x68] sm:$0x1]
        %v303 = vld [vmem:[%s263 + $0x70] sm:$0xff]
        %v304 = vld [vmem:[%s263 + $0x78] sm:$0x1]
        %v305 = vld [vmem:[%s1] sm:$0xff]
        %v306 = vld [vmem:[%s1 + $0x8] sm:$0x1]
        %308 = vset.pattern.permute.xlu0 0
        %309 = vperm.xlu0 %308, %v305
        %v310 = vpop.permute.xlu0 %309
        %313 = vset.pattern.permute.xlu0 0
        %314 = vperm.xlu0 %313, %v306
        %v315 = vpop.permute.xlu0 %314
        %v317 = vmul.f32 %v289, %v310
        %v318 = vmul.f32 %v290, %v315
        %v319 = vmul.f32 %v291, %v310
        %v320 = vmul.f32 %v292, %v315
        %v321 = vmul.f32 %v293, %v310
        %v322 = vmul.f32 %v294, %v315
        %v323 = vmul.f32 %v295, %v310
        %v324 = vmul.f32 %v296, %v315
        %v325 = vmul.f32 %v297, %v310
        %v326 = vmul.f32 %v298, %v315
        %v327 = vmul.f32 %v299, %v310
        %v328 = vmul.f32 %v300, %v315
        %v329 = vmul.f32 %v301, %v310
        %v330 = vmul.f32 %v302, %v315
        %v331 = vmul.f32 %v303, %v310
        %v332 = vmul.f32 %v304, %v315
        %vm333 = vcmask 1040384
        %v334 = vsel %vm333, %v318, 0.0
        %v335 = vadd.f32 %v317, %v334
        %v336 = vrot.slane %v335, 4
        %v337 = vadd.f32 %v335, %v336
        %v338 = vrot.slane %v337, 2
        %v339 = vadd.f32 %v337, %v338
        %v340 = vrot.slane %v339, 1
        %v341 = vadd.f32 %v339, %v340
        %v342 = vsel %vm333, %v320, 0.0
        %v343 = vadd.f32 %v319, %v342
        %v344 = vrot.slane %v343, 4
        %v345 = vadd.f32 %v343, %v344
        %v346 = vrot.slane %v345, 2
        %v347 = vadd.f32 %v345, %v346
        %v348 = vrot.slane %v347, 1
        %v349 = vadd.f32 %v347, %v348
        %v350 = vsel %vm333, %v322, 0.0
        %v351 = vadd.f32 %v321, %v350
        %v352 = vrot.slane %v351, 4
        %v353 = vadd.f32 %v351, %v352
        %v354 = vrot.slane %v353, 2
        %v355 = vadd.f32 %v353, %v354
        %v356 = vrot.slane %v355, 1
        %v357 = vadd.f32 %v355, %v356
        %v358 = vsel %vm333, %v324, 0.0
        %v359 = vadd.f32 %v323, %v358
        %v360 = vrot.slane %v359, 4
        %v361 = vadd.f32 %v359, %v360
        %v362 = vrot.slane %v361, 2
        %v363 = vadd.f32 %v361, %v362
        %v364 = vrot.slane %v363, 1
        %v365 = vadd.f32 %v363, %v364
        %v366 = vsel %vm333, %v326, 0.0
        %v367 = vadd.f32 %v325, %v366
        %v368 = vrot.slane %v367, 4
        %v369 = vadd.f32 %v367, %v368
        %v370 = vrot.slane %v369, 2
        %v371 = vadd.f32 %v369, %v370
        %v372 = vrot.slane %v371, 1
        %v373 = vadd.f32 %v371, %v372
        %v374 = vsel %vm333, %v328, 0.0
        %v375 = vadd.f32 %v327, %v374
        %v376 = vrot.slane %v375, 4
        %v377 = vadd.f32 %v375, %v376
        %v378 = vrot.slane %v377, 2
        %v379 = vadd.f32 %v377, %v378
        %v380 = vrot.slane %v379, 1
        %v381 = vadd.f32 %v379, %v380
        %v382 = vsel %vm333, %v330, 0.0
        %v383 = vadd.f32 %v329, %v382
        %v384 = vrot.slane %v383, 4
        %v385 = vadd.f32 %v383, %v384
        %v386 = vrot.slane %v385, 2
        %v387 = vadd.f32 %v385, %v386
        %v388 = vrot.slane %v387, 1
        %v389 = vadd.f32 %v387, %v388
        %v390 = vsel %vm333, %v332, 0.0
        %v391 = vadd.f32 %v331, %v390
        %v392 = vrot.slane %v391, 4
        %v393 = vadd.f32 %v391, %v392
        %v394 = vrot.slane %v393, 2
        %v395 = vadd.f32 %v393, %v394
        %v396 = vrot.slane %v395, 1
        %v397 = vadd.f32 %v395, %v396
        %vm406 = vcmask 1041409
        %v407 = vsel %vm406, %v349, %v341
        %vm408 = vcmask 1042434
        %v409 = vsel %vm408, %v357, %v407
        %vm410 = vcmask 1043459
        %v411 = vsel %vm410, %v365, %v409
        %vm412 = vcmask 1044484
        %v413 = vsel %vm412, %v373, %v411
        %vm414 = vcmask 1045509
        %v415 = vsel %vm414, %v381, %v413
        %vm416 = vcmask 1046534
        %v417 = vsel %vm416, %v389, %v415
        %vm418 = vcmask 1047559
        %v419 = vsel %vm418, %v397, %v417
        %421 = vst [vmem:[%s281] sm:$0xff] %v419
        %s422 = sand.u32 %s87, 1
        %s423 = scalar_lea.sflag [#allocation4], %s422
        %s424 = sand.u32 %s87, 1
        %s425 = smul.addr %s424, 8
        %s426 = scalar_lea.vmem [#allocation3], %s425
        // Predicated region
        $region81: #{tpu_custom_call.1} parent=75 // pred_check
          %p427 = pneg %p97
        $region82: #{tpu_custom_call.1} parent=75 // pred_check_branch
          %429 = sbr.rel (%p427) target = $region84
        $region83: #{tpu_custom_call.1} parent=75 // pred_region
          %s430 = smul.u32 4, %s20
          %s431 = ssub.s32 1, %s430
          %s432 = smul.u32 2, %s431
          %s433 = ssub.s32 8, %s432
          %s434 = sshll.u32 %s433, 4
          %435 = vsyncadd %s423, %s434
          %p436 = scmp.ne.s32.totalorder 0, %s432
          %s437 = smul.addr %s430, 2
          %s438 = sadd.s32 %s21, %s437
          %s439 = smul.addr %s438, 2
          %s440 = scalar_lea.hbm %s2, %s439
          %s441 = smul.u32 2, %s431
          %s442 = sshll.u32 %s426, 4
          %s443 = int_to_ptr.vmem [resolvable:$true] %s442
          %s444 = sshll.u32 %s440, 4
          %s445 = int_to_ptr.hbm [resolvable:$true] %s444
          %s446 = sshll.u32 %s441, 4
          %450 = dma.vmem_to_hbm [thread:$0]  (%p436), %s443, %s446, %s445, %s423, 32, 64, 2
        $region84: #{tpu_custom_call.1} parent=75 // pred_fallthru
          _
      $region76: #{tpu_custom_call.1} parent=5 // pred_fallthru
        _
      %p451 = scmp.le.s32.totalorder 2, %s11
      // Predicated region
      $region85: #{tpu_custom_call.1} parent=5 // pred_check
        %p452 = pneg %p451
      $region86: #{tpu_custom_call.1} parent=5 // pred_check_branch
        %454 = sbr.rel (%p452) target = $region88
      $region87: #{tpu_custom_call.1} parent=5 // pred_region
        %s455 = ssub.s32 %s11, 2
        // Predicated region
        $region89: #{tpu_custom_call.1} parent=87 // pred_check
          %p456 = pneg %p103
        $region90: #{tpu_custom_call.1} parent=87 // pred_check_branch
          %458 = sbr.rel (%p456) target = $region92
        $region91: #{tpu_custom_call.1} parent=87 // pred_region
          %s459 = sand.u32 %s88, 1
          %s460 = scalar_lea.sflag [#allocation4], %s459
          %s461 = sand.u32 %s88, 1
          %s462 = smul.addr %s461, 8
          %s463 = scalar_lea.vmem [#allocation3], %s462
          %465 = dma.done %s460, 128
        $region92: #{tpu_custom_call.1} parent=87 // pred_fallthru
          _
      $region88: #{tpu_custom_call.1} parent=5 // pred_fallthru
        _
    $region6: #{tpu_custom_call.1} parent=1 // loop_footer
      %s15 = sadd.s32 1, %s11
    $region7: #{tpu_custom_call.1} parent=1 // loop_footer_branch
      %10 = sbr.rel target = $region3
    $region8: #{tpu_custom_call.1} parent=1 // loop_exit
      _
    %466 = vsyncpa [#allocation4], 1
    %s467 = scalar_lea.sflag [#allocation4], 1
    %468 = vsyncpa %s467, 1

</llo_original>
